<compile_context>
chip_gen: v7x
topology: tpu7x:2x2x1
jax: 0.10.0
libtpu: 0.0.40
codegen_flags: <defaults>
</compile_context>

<pallas_src>
import functools

import jax
import jax.numpy as jnp
from jax.experimental import pallas as pl
from jax.experimental.pallas import tpu as pltpu


def _focal_kernel(t_ref, x_ref, o_ref, *, gamma, n_pixels, tile_pixels):
    """One (batch, pixel-tile) block of focal loss; writes its partial sum.

    t_ref: (1, 1, TN) int32 targets      (pixels on lanes)
    x_ref: (1, C, TN) logits             (classes on sublanes, pixels on lanes)
    o_ref: (1, 1, 1)  f32 partial sum for this grid step
    """
    j = pl.program_id(1)

    x = x_ref[0].astype(jnp.float32)                  # (C, TN) f32 in-register
    t = t_ref[0]                                      # (1, TN) int32
    C, TN = x.shape

    # one-hot over the (small) class/sublane axis — pure VPU compare
    cls = jax.lax.broadcasted_iota(jnp.int32, (C, TN), 0)
    onehot = cls == t                                 # (C, TN) bool

    # numerically stable softmax pieces, reduced over the class (sublane) axis
    m = jnp.max(x, axis=0, keepdims=True)             # (1, TN)
    e = jnp.exp(x - m)                                # (C, TN)  EUP
    denom = jnp.sum(e, axis=0, keepdims=True)         # (1, TN)
    picked = jnp.sum(jnp.where(onehot, x, 0.0), axis=0, keepdims=True)  # x_target

    log_p = (picked - m) - jnp.log(denom)             # log softmax prob of target
    p = jnp.exp(log_p)                                # softmax prob of target
    loss = -((1.0 - p) ** gamma) * log_p              # (1, TN) focal loss / pixel

    # mask out-of-range pixels of the (possibly ragged) last tile
    base = j * tile_pixels
    lane = jax.lax.broadcasted_iota(jnp.int32, (1, TN), 1)
    valid = (base + lane) < n_pixels
    loss = jnp.where(valid, loss, 0.0)

    tile_sum = jnp.sum(loss, axis=-1, keepdims=True)  # (1, 1) — one XLU reduce/tile
    o_ref[...] = tile_sum.reshape(1, 1, 1)


@functools.partial(jax.jit,
                   static_argnames=("gamma", "size_average", "tile_pixels"))
def context_focal_loss(logits_nchw, target_nhw, category=None, gamma=2,
                       size_average=True, tile_pixels=32768):
    """JAX/Pallas equivalent of ContextFocalLoss.forward."""
    del category  # unused by ContextFocalLoss.forward (kept for API parity)

    N, C, H, W = logits_nchw.shape
    P = H * W

    # Free reshapes (contiguous trailing dims) — no transpose / pad / cast.
    x = logits_nchw.reshape(N, C, P)
    t = target_nhw.reshape(N, 1, P).astype(jnp.int32)

    # static gamma: prefer integer power (cheap VPU multiply) when possible
    g = int(gamma) if float(gamma) == int(gamma) else float(gamma)

    # Pixel tile: multiple of 128 lanes, or the full pixel extent if smaller.
    req = max(128, (int(tile_pixels) // 128) * 128)
    TN = P if P <= req else req
    J = pl.cdiv(P, TN)

    kernel = functools.partial(_focal_kernel, gamma=g, n_pixels=P,
                               tile_pixels=TN)

    partials = pl.pallas_call(
        kernel,
        out_shape=jax.ShapeDtypeStruct((N * J, 1, 1), jnp.float32),
        grid=(N, J),
        in_specs=[
            pl.BlockSpec((1, 1, TN), lambda n, j: (n, 0, j)),   # targets
            pl.BlockSpec((1, C, TN), lambda n, j: (n, 0, j)),   # logits
        ],
        out_specs=pl.BlockSpec((1, 1, 1), lambda n, j: (n * J + j, 0, 0)),
        compiler_params=pltpu.CompilerParams(
            dimension_semantics=("parallel", "parallel")),
    )(t, x)

    total = jnp.sum(partials)
    if size_average:
        return total / (N * P)
    return total


def _reference_focal(logits_nchw, target_nhw, gamma=2, size_average=True):
    """Pure-JAX reference mirroring the PyTorch module."""
    N, C = logits_nchw.shape[:2]
    x = logits_nchw.reshape(N, C, -1).astype(jnp.float32)
    p = jax.nn.softmax(x, axis=1)
    t = target_nhw.reshape(N, 1, -1)
    onehot = (jnp.arange(C, dtype=jnp.int32)[None, :, None] == t).astype(jnp.float32)
    prob = jnp.sum(p * onehot, axis=1)                # (N, P)
    loss = -((1.0 - prob) ** gamma) * jnp.log(prob)
    return jnp.mean(loss) if size_average else jnp.sum(loss)


if __name__ == "__main__":
    key = jax.random.PRNGKey(0)
    ok = True

    # case 1: module-scale example (N=2, C=4, 16x16), gamma=2, mean reduction
    k1, k2 = jax.random.split(key)
    logits = jax.random.normal(k1, (2, 4, 16, 16), jnp.float32)
    target = jax.random.randint(k2, (2, 16, 16), 0, 4, jnp.int32)
    category = jnp.int32(1)   # unused by the forward pass
    got = jax.block_until_ready(context_focal_loss(logits, target, category))
    ref = _reference_focal(logits, target)
    ok &= bool(jnp.allclose(got, ref, rtol=1e-5, atol=1e-5))

    # case 2: sum reduction (size_average=False)
    got = jax.block_until_ready(
        context_focal_loss(logits, target, category, size_average=False))
    ref = _reference_focal(logits, target, size_average=False)
    ok &= bool(jnp.allclose(got, ref, rtol=1e-5, atol=1e-5))

    # case 3: odd class count and non-128-multiple pixel count (C=5, P=100)
    k3, k4 = jax.random.split(k1)
    logits2 = jax.random.normal(k3, (3, 5, 10, 10), jnp.float32)
    target2 = jax.random.randint(k4, (3, 10, 10), 0, 5, jnp.int32)
    got = jax.block_until_ready(context_focal_loss(logits2, target2, category))
    ref = _reference_focal(logits2, target2)
    ok &= bool(jnp.allclose(got, ref, rtol=1e-5, atol=1e-5))

    # case 4: multi-tile grid with ragged last tile + bf16 logits streamed as-is
    k5, k6 = jax.random.split(k3)
    logits3 = jax.random.normal(k5, (1, 4, 24, 24), jnp.float32).astype(jnp.bfloat16)
    target3 = jax.random.randint(k6, (1, 24, 24), 0, 4, jnp.int32)
    got = jax.block_until_ready(
        context_focal_loss(logits3, target3, category, tile_pixels=256))
    ref = _reference_focal(logits3, target3)
    ok &= bool(jnp.allclose(got, ref, rtol=1e-3, atol=1e-3))

    print("KERNEL_OK" if ok else "MISMATCH")
</pallas_src>

<mosaic_0001>
module attributes {stable_mosaic.version = 11 : i64} {
  func.func @_focal_kernel(%arg0: i32, %arg1: i32, %arg2: memref<1x1x256xi32, #tpu.memory_space<vmem>>, %arg3: memref<1x4x256xf32, #tpu.memory_space<vmem>>, %arg4: memref<1x1x1xf32, #tpu.memory_space<vmem>>) attributes {dimension_semantics = [#tpu.dimension_semantics<parallel>, #tpu.dimension_semantics<parallel>], iteration_bounds = array<i64: 2, 1>, scalar_prefetch = 0 : i64, scratch_operands = 0 : i64, tpu.core_type = #tpu.core_type<tc>, window_params = [{transform_indices = @transform_0, window_bounds = array<i64: 1, 1, 256>}, {transform_indices = @transform_1, window_bounds = array<i64: 1, 4, 256>}, {transform_indices = @transform_2, window_bounds = array<i64: 1, 1, 1>}]} {
    %c0 = arith.constant 0 : index
    %c0_0 = arith.constant 0 : index
    %c0_1 = arith.constant 0 : index
    %0 = vector.load %arg3[%c0, %c0_0, %c0_1] : memref<1x4x256xf32, #tpu.memory_space<vmem>>, vector<1x4x256xf32>
    %1 = vector.shape_cast %0 : vector<1x4x256xf32> to vector<4x256xf32>
    %c0_2 = arith.constant 0 : index
    %c0_3 = arith.constant 0 : index
    %c0_4 = arith.constant 0 : index
    %2 = vector.load %arg2[%c0_2, %c0_3, %c0_4] : memref<1x1x256xi32, #tpu.memory_space<vmem>>, vector<1x1x256xi32>
    %3 = vector.shape_cast %2 : vector<1x1x256xi32> to vector<1x256xi32>
    %4 = tpu.iota {dimensions = array<i32: 0>} : vector<4x256xi32>
    %5 = vector.broadcast %3 : vector<1x256xi32> to vector<4x256xi32>
    %6 = arith.cmpi eq, %4, %5 : vector<4x256xi32>
    %cst = arith.constant dense<0xFF800000> : vector<256xf32>
    %7 = vector.multi_reduction <maximumf>, %1, %cst [0] : vector<4x256xf32> to vector<256xf32>
    %8 = vector.shape_cast %7 : vector<256xf32> to vector<1x256xf32>
    %9 = vector.broadcast %8 : vector<1x256xf32> to vector<4x256xf32>
    %10 = arith.subf %1, %9 : vector<4x256xf32>
    %11 = math.exp %10 : vector<4x256xf32>
    %cst_5 = arith.constant dense<0.000000e+00> : vector<256xf32>
    %12 = vector.multi_reduction <add>, %11, %cst_5 [0] : vector<4x256xf32> to vector<256xf32>
    %13 = vector.shape_cast %12 : vector<256xf32> to vector<1x256xf32>
    %cst_6 = arith.constant 0.000000e+00 : f32
    %14 = vector.broadcast %cst_6 : f32 to vector<4x256xf32>
    %15 = arith.select %6, %1, %14 : vector<4x256xi1>, vector<4x256xf32>
    %cst_7 = arith.constant dense<0.000000e+00> : vector<256xf32>
    %16 = vector.multi_reduction <add>, %15, %cst_7 [0] : vector<4x256xf32> to vector<256xf32>
    %17 = vector.shape_cast %16 : vector<256xf32> to vector<1x256xf32>
    %18 = arith.subf %17, %8 : vector<1x256xf32>
    %19 = math.log %13 : vector<1x256xf32>
    %20 = arith.subf %18, %19 : vector<1x256xf32>
    %21 = math.exp %20 : vector<1x256xf32>
    %cst_8 = arith.constant 1.000000e+00 : f32
    %22 = vector.broadcast %cst_8 : f32 to vector<1x256xf32>
    %23 = arith.subf %22, %21 : vector<1x256xf32>
    %24 = arith.mulf %23, %23 : vector<1x256xf32>
    %cst_9 = arith.constant 0.000000e+00 : f32
    %25 = vector.broadcast %cst_9 : f32 to vector<1x256xf32>
    %26 = arith.subf %25, %24 : vector<1x256xf32>
    %27 = arith.mulf %26, %20 : vector<1x256xf32>
    %c256_i32 = arith.constant 256 : i32
    %28 = arith.muli %arg1, %c256_i32 : i32
    %29 = tpu.iota {dimensions = array<i32: 1>} : vector<1x256xi32>
    %30 = vector.broadcast %28 : i32 to vector<1x256xi32>
    %31 = arith.addi %30, %29 : vector<1x256xi32>
    %c256_i32_10 = arith.constant 256 : i32
    %32 = vector.broadcast %c256_i32_10 : i32 to vector<1x256xi32>
    %33 = arith.cmpi slt, %31, %32 : vector<1x256xi32>
    %cst_11 = arith.constant 0.000000e+00 : f32
    %34 = vector.broadcast %cst_11 : f32 to vector<1x256xf32>
    %35 = arith.select %33, %27, %34 : vector<1x256xi1>, vector<1x256xf32>
    %cst_12 = arith.constant dense<0.000000e+00> : vector<1xf32>
    %36 = vector.multi_reduction <add>, %35, %cst_12 [1] : vector<1x256xf32> to vector<1xf32>
    %37 = vector.shape_cast %36 : vector<1xf32> to vector<1x1xf32>
    %38 = vector.shape_cast %37 : vector<1x1xf32> to vector<1x1x1xf32>
    %c0_13 = arith.constant 0 : index
    %c0_14 = arith.constant 0 : index
    %c0_15 = arith.constant 0 : index
    %39 = vector.load %arg4[%c0_13, %c0_14, %c0_15] : memref<1x1x1xf32, #tpu.memory_space<vmem>>, vector<1x1x1xf32>
    tpu.vector_store %arg4[%c0_13, %c0_14, %c0_15], %38 {strides = array<i32>} : memref<1x1x1xf32, #tpu.memory_space<vmem>>, vector<1x1x1xf32>,
    return
  }
  func.func @transform_0(%arg0: i32, %arg1: i32) -> (i32, i32, i32) {
    %c0_i32 = arith.constant 0 : i32
    %c0_i32_0 = arith.constant 0 : i32
    return %arg0, %c0_i32, %arg1 : i32, i32, i32
  }
  func.func @transform_1(%arg0: i32, %arg1: i32) -> (i32, i32, i32) {
    %c0_i32 = arith.constant 0 : i32
    %c0_i32_0 = arith.constant 0 : i32
    return %arg0, %c0_i32, %arg1 : i32, i32, i32
  }
  func.func @transform_2(%arg0: i32, %arg1: i32) -> (i32, i32, i32) {
    %c1_i32 = arith.constant 1 : i32
    %0 = arith.muli %arg0, %c1_i32 : i32
    %1 = arith.addi %0, %arg1 : i32
    %c0_i32 = arith.constant 0 : i32
    %c0_i32_0 = arith.constant 0 : i32
    %c0_i32_1 = arith.constant 0 : i32
    return %1, %c0_i32, %c0_i32_0 : i32, i32, i32
  }
}

</mosaic_0001>

<llo_original>
// kernel: context_focal_loss.1
$region0: #{context_focal_loss.1}
  #allocation0 [shape = 'u32[]', space=smem, size = 0x4, offset = 0x4, fixed_abs, tag = 'smem constant byte address 0x4 - core index']
  #allocation1 [shape = 'u32[144,128]{1,0:T(1,128)}', space=vmem, size = 0x12000, scoped, tag = 'internal scratch']
  %s0 = inlined_call_operand.vmem [shape: s32[2,1,256], index: 0, kind: input, shape index: {}]
  %s1 = inlined_call_operand.vmem [shape: f32[2,4,256], index: 1, kind: input, shape index: {}]
  %s2 = inlined_call_operand.vmem [shape: f32[2,1,1], index: 2, kind: output, shape index: {}]
  %s3 = sld [smem:[#allocation0]]
  $region41: #{context_focal_loss.1} parent=0
    _
  %s5 = ssub.s32 1, %s3
  %s6 = scalar_select 0, %s5, %s3
  loop: start=0, step=1, limit=4
  $region2: #{context_focal_loss.1} parent=0 // loop_pre_header
    _
  $region3: #{context_focal_loss.1} parent=0 // loop_header
    %s8 = sphi 0, %s12
    %p9 = scmp.ge.s32.totalorder %s8, 4
    %s15 = sphi 0, %s27
    %s16 = sphi 0, %s23
    %s17 = sphi 0, %s15
    %s18 = sphi 0, %s16
    %s19 = sphi 0, %s17
    %s20 = sphi 0, %s18
    %s32 = sphi 0, %s34
    %s35 = sphi 0, %s32
    %s36 = sphi 0, %s35
    %s52 = sphi 0, %s36
    %s60 = sphi 0, %s62
    %s63 = sphi 0, %s60
    %s64 = sphi 0, %s63
    %s80 = sphi 0, %s64
    %s88 = sphi 0, %s90
    %s91 = sphi 0, %s88
    %s92 = sphi 0, %s91
    %s108 = sphi 0, %s92
  $region4: #{context_focal_loss.1} parent=0 // loop_header_branch
    %11 = sbr.rel (%p9) target = $region8
  $region5: #{context_focal_loss.1} parent=0 // loop_body
    %s13 = ssub.s32 %s8, 1
    %s14 = ssub.s32 %s8, 2
    %s21 = sadd.s32 1, %s16
    %p22 = scmp.ge.s32.totalorder %s21, 1
    %s23 = scalar_select %p22, 0, %s21
    %s24 = sadd.s32 1, %s15
    %s25 = scalar_select %p22, %s24, %s15
    %p26 = scmp.ge.s32.totalorder %s25, 2
    %s27 = scalar_select %p26, 0, %s25
    %s28 = ssub.s32 %s15, %s27
    %s29 = ssub.s32 %s16, %s23
    %s30 = sor.u32 %s28, %s29
    %p31 = scmp.eq.s32.totalorder %s30, 0
    %s33 = sadd.s32 %s32, 1
    %s34 = scalar_select %p31, %s32, %s33
    %p37 = pneg %p31
    %p38 = scmp.eq.s32.totalorder %s8, 1
    %p39 = por %p37, %p38
    %p40 = scmp.ne.s32.totalorder %s32, %s35
    %p41 = scmp.eq.s32.totalorder %s8, 0
    %p42 = por %p40, %p41
    %p43 = scmp.ne.s32.totalorder %s32, %s35
    %p44 = scmp.eq.s32.totalorder %s13, 1
    %p45 = por %p43, %p44
    %p46 = scmp.ne.s32.totalorder %s35, %s36
    %p47 = scmp.eq.s32.totalorder %s13, 0
    %p48 = por %p46, %p47
    %p49 = scmp.ne.s32.totalorder %s35, %s36
    %p50 = scmp.eq.s32.totalorder %s14, 1
    %p51 = por %p49, %p50
    %p53 = scmp.ne.s32.totalorder %s36, %s52
    %p54 = scmp.eq.s32.totalorder %s14, 0
    %p55 = por %p53, %p54
    %s56 = ssub.s32 %s15, %s27
    %s57 = ssub.s32 %s16, %s23
    %s58 = sor.u32 %s56, %s57
    %p59 = scmp.eq.s32.totalorder %s58, 0
    %s61 = sadd.s32 %s60, 1
    %s62 = scalar_select %p59, %s60, %s61
    %p65 = pneg %p59
    %p66 = scmp.eq.s32.totalorder %s8, 1
    %p67 = por %p65, %p66
    %p68 = scmp.ne.s32.totalorder %s60, %s63
    %p69 = scmp.eq.s32.totalorder %s8, 0
    %p70 = por %p68, %p69
    %p71 = scmp.ne.s32.totalorder %s60, %s63
    %p72 = scmp.eq.s32.totalorder %s13, 1
    %p73 = por %p71, %p72
    %p74 = scmp.ne.s32.totalorder %s63, %s64
    %p75 = scmp.eq.s32.totalorder %s13, 0
    %p76 = por %p74, %p75
    %p77 = scmp.ne.s32.totalorder %s63, %s64
    %p78 = scmp.eq.s32.totalorder %s14, 1
    %p79 = por %p77, %p78
    %p81 = scmp.ne.s32.totalorder %s64, %s80
    %p82 = scmp.eq.s32.totalorder %s14, 0
    %p83 = por %p81, %p82
    %s84 = sadd.s32 %s15, %s16
    %s85 = sadd.s32 %s27, %s23
    %s86 = ssub.s32 %s84, %s85
    %p87 = scmp.eq.s32.totalorder %s86, 0
    %s89 = sadd.s32 %s88, 1
    %s90 = scalar_select %p87, %s88, %s89
    %p93 = pneg %p87
    %p94 = scmp.eq.s32.totalorder %s8, 1
    %p95 = por %p93, %p94
    %p96 = scmp.ne.s32.totalorder %s88, %s91
    %p97 = scmp.eq.s32.totalorder %s8, 0
    %p98 = por %p96, %p97
    %p99 = scmp.ne.s32.totalorder %s88, %s91
    %p100 = scmp.eq.s32.totalorder %s13, 1
    %p101 = por %p99, %p100
    %p102 = scmp.ne.s32.totalorder %s91, %s92
    %p103 = scmp.eq.s32.totalorder %s13, 0
    %p104 = por %p102, %p103
    %p105 = scmp.ne.s32.totalorder %s91, %s92
    %p106 = scmp.eq.s32.totalorder %s14, 1
    %p107 = por %p105, %p106
    %p109 = scmp.ne.s32.totalorder %s92, %s108
    %p110 = scmp.eq.s32.totalorder %s14, 0
    %p111 = por %p109, %p110
    %p112 = scmp.le.s32.totalorder 1, %s8
    %p113 = scmp.lt.s32.totalorder %s8, 3
    %p114 = pnand %p112, %p113
    %p115 = pneg %p114
    // Predicated region
    $region9: #{context_focal_loss.1} parent=5 // pred_check
      _
    $region10: #{context_focal_loss.1} parent=5 // pred_check_branch
      %117 = sbr.rel (%p114) target = $region12
    $region11: #{context_focal_loss.1} parent=5 // pred_region
      %s118 = ssub.s32 %s8, 1
    $region12: #{context_focal_loss.1} parent=5 // pred_fallthru
      _
    %p119 = scmp.lt.s32.totalorder %s8, 2
    // Predicated region
    $region13: #{context_focal_loss.1} parent=5 // pred_check
      %p120 = pneg %p119
    $region14: #{context_focal_loss.1} parent=5 // pred_check_branch
      %122 = sbr.rel (%p120) target = $region16
    $region15: #{context_focal_loss.1} parent=5 // pred_region
      // Predicated region
      $region17: #{context_focal_loss.1} parent=15 // pred_check
        %p123 = pneg %p42
      $region18: #{context_focal_loss.1} parent=15 // pred_check_branch
        %125 = sbr.rel (%p123) target = $region20
      $region19: #{context_focal_loss.1} parent=15 // pred_region
        %s126 = smul.u32 2, %s16
        %p127 = scmp.lt.s32.totalorder %s15, 1
        %s128 = scalar_select %p127, %s15, 1
        %p129 = scmp.lt.s32.totalorder %s126, 1
        %s130 = scalar_select %p129, %s126, 1
        %s131 = smul.addr %s128, 2
        %s132 = sadd.s32 %s130, %s131
        %s133 = scalar_lea.vmem %s0, %s132
        %s134 = smul.u32 2, %s16
      $region20: #{context_focal_loss.1} parent=15 // pred_fallthru
        _
      // Predicated region
      $region21: #{context_focal_loss.1} parent=15 // pred_check
        %p135 = pneg %p70
      $region22: #{context_focal_loss.1} parent=15 // pred_check_branch
        %137 = sbr.rel (%p135) target = $region24
      $region23: #{context_focal_loss.1} parent=15 // pred_region
        %s138 = smul.u32 2, %s16
        %p139 = scmp.lt.s32.totalorder %s15, 1
        %s140 = scalar_select %p139, %s15, 1
        %p141 = scmp.lt.s32.totalorder %s138, 1
        %s142 = scalar_select %p141, %s138, 1
        %s143 = smul.addr %s140, 2
        %s144 = sadd.s32 %s142, %s143
        %s145 = smul.addr %s144, 4
        %s146 = scalar_lea.vmem %s1, %s145
        %s147 = smul.u32 2, %s16
      $region24: #{context_focal_loss.1} parent=15 // pred_fallthru
        _
    $region16: #{context_focal_loss.1} parent=5 // pred_fallthru
      _
    %p148 = scmp.le.s32.totalorder 1, %s8
    %p149 = scmp.lt.s32.totalorder %s8, 3
    %p150 = pnand %p148, %p149
    %p151 = pneg %p150
    // Predicated region
    $region25: #{context_focal_loss.1} parent=5 // pred_check
      _
    $region26: #{context_focal_loss.1} parent=5 // pred_check_branch
      %153 = sbr.rel (%p150) target = $region28
    $region27: #{context_focal_loss.1} parent=5 // pred_region
      %s154 = ssub.s32 %s8, 1
      %s155 = smul.u32 2, %s18
      %p156 = scmp.lt.s32.totalorder %s17, 1
      %s157 = scalar_select %p156, %s17, 1
      %p158 = scmp.lt.s32.totalorder %s155, 1
      %s159 = scalar_select %p158, %s155, 1
      %s160 = smul.addr %s157, 2
      %s161 = sadd.s32 %s159, %s160
      %s162 = scalar_lea.vmem %s0, %s161
      %p163 = pneg %p48
      %p164 = pneg %p45
      %s165 = smul.u32 2, %s18
      %p166 = scmp.lt.s32.totalorder %s17, 1
      %s167 = scalar_select %p166, %s17, 1
      %p168 = scmp.lt.s32.totalorder %s165, 1
      %s169 = scalar_select %p168, %s165, 1
      %s170 = smul.addr %s167, 2
      %s171 = sadd.s32 %s169, %s170
      %s172 = smul.addr %s171, 4
      %s173 = scalar_lea.vmem %s1, %s172
      %p174 = pneg %p76
      %p175 = pneg %p73
      %p176 = pneg %p104
      %p177 = pneg %p101
      %s178 = sadd.s32 %s17, %s18
      %p179 = scmp.lt.s32.totalorder %s178, 1
      %s180 = scalar_select %p179, %s178, 1
      %s181 = scalar_lea.vmem %s2, %s180
      %s182 = smul.u32 2, %s18
      %p183 = scmp.lt.s32.totalorder %s17, 1
      %s184 = scalar_select %p183, %s17, 1
      %p185 = scmp.lt.s32.totalorder %s182, 1
      %s186 = scalar_select %p185, %s182, 1
      %s187 = smul.addr %s184, 2
      %s188 = sadd.s32 %s186, %s187
      %s189 = scalar_lea.vmem %s0, %s188
      %s190 = smul.u32 2, %s18
      %s191 = smul.u32 2, %s18
      %p192 = scmp.lt.s32.totalorder %s17, 1
      %s193 = scalar_select %p192, %s17, 1
      %p194 = scmp.lt.s32.totalorder %s191, 1
      %s195 = scalar_select %p194, %s191, 1
      %s196 = smul.addr %s193, 2
      %s197 = sadd.s32 %s195, %s196
      %s198 = smul.addr %s197, 4
      %s199 = scalar_lea.vmem %s1, %s198
      %s200 = smul.u32 2, %s18
      %s201 = sadd.s32 %s17, %s18
      %p202 = scmp.lt.s32.totalorder %s201, 1
      %s203 = scalar_select %p202, %s201, 1
      %s204 = scalar_lea.vmem %s2, %s203
      %s205 = sadd.s32 %s17, %s18
      %v206 = vld [vmem:[%s199] sm:$0xff]
      %v207 = vld [vmem:[%s189] sm:$0x3]
      %v208 = vlaneseq
      %v209 = vshrl.u32 %v208, 7
      %v210 = vlaneseq
      %v211 = vshrl.u32 %v210, 7
      %v212 = vsub.s32 0, %v211
      %v213 = vrot.slane %v207, %v212
      %v214 = vlaneseq
      %v215 = vshrl.u32 %v214, 7
      %v216 = vsub.s32 1, %v215
      %v217 = vrot.slane %v207, %v216
      %vm218 = vcmp.eq.s32.totalorder %v209, %v213
      %vm219 = vcmp.eq.s32.totalorder %v209, %v217
      %v221 = vcombine.high %v206, %v206
      %vm223 = vcmask 1043456
      %v224 = vsel %vm223, %v206, -inf
      %v225 = vrot.slane %v224, 4
      %v226 = vmax.f32 %v224, %v225
      %v227 = vrot.slane %v226, 2
      %v228 = vmax.f32 %v226, %v227
      %v229 = vrot.slane %v228, 1
      %v230 = vmax.f32 %v228, %v229
      %v231 = vsel %vm223, %v221, -inf
      %v232 = vrot.slane %v231, 4
      %v233 = vmax.f32 %v231, %v232
      %v234 = vrot.slane %v233, 2
      %v235 = vmax.f32 %v233, %v234
      %v236 = vrot.slane %v235, 1
      %v237 = vmax.f32 %v235, %v236
      %v240 = vcombine.low %v230, %v237
      %v242 = vsub.f32 %v206, %v240
      %v243 = vmul.f32 %v242, 1.442695
      %v244 = vpow.pop %v243
      %v246 = vcombine.high %v244, %v244
      %v248 = vsel %vm223, %v244, 0.0
      %v249 = vrot.slane %v248, 4
      %v250 = vadd.f32 %v248, %v249
      %v251 = vrot.slane %v250, 2
      %v252 = vadd.f32 %v250, %v251
      %v253 = vrot.slane %v252, 1
      %v254 = vadd.f32 %v252, %v253
      %v255 = vsel %vm223, %v246, 0.0
      %v256 = vrot.slane %v255, 4
      %v257 = vadd.f32 %v255, %v256
      %v258 = vrot.slane %v257, 2
      %v259 = vadd.f32 %v257, %v258
      %v260 = vrot.slane %v259, 1
      %v261 = vadd.f32 %v259, %v260
      %v262 = vsel %vm218, %v206, 0.0
      %v263 = vsel %vm219, %v221, 0.0
      %v264 = vsel %vm223, %v262, 0.0
      %v265 = vrot.slane %v264, 4
      %v266 = vadd.f32 %v264, %v265
      %v267 = vrot.slane %v266, 2
      %v268 = vadd.f32 %v266, %v267
      %v269 = vrot.slane %v268, 1
      %v270 = vadd.f32 %v268, %v269
      %v271 = vsel %vm223, %v263, 0.0
      %v272 = vrot.slane %v271, 4
      %v273 = vadd.f32 %v271, %v272
      %v274 = vrot.slane %v273, 2
      %v275 = vadd.f32 %v273, %v274
      %v276 = vrot.slane %v275, 1
      %v277 = vadd.f32 %v275, %v276
      %v278 = vsub.f32 %v270, %v230
      %v279 = vsub.f32 %v277, %v237
      %v280 = vlog2.pop %v254
      %v281 = vmul.f32 %v280, 0.6931472
      %v282 = vlog2.pop %v261
      %v283 = vmul.f32 %v282, 0.6931472
      %v284 = vsub.f32 %v278, %v281
      %v285 = vsub.f32 %v279, %v283
      %v286 = vmul.f32 %v284, 1.442695
      %v287 = vpow.pop %v286
      %v288 = vmul.f32 %v285, 1.442695
      %v289 = vpow.pop %v288
      %v290 = vsub.f32 1.0, %v287
      %v291 = vsub.f32 1.0, %v289
      %v292 = vmul.f32 %v290, %v290
      %v293 = vmul.f32 %v291, %v291
      %v294 = vsub.f32 0.0, %v292
      %v295 = vsub.f32 0.0, %v293
      %v296 = vmul.f32 %v294, %v284
      %v297 = vmul.f32 %v295, %v285
      %s298 = smul.u32 %s18, 256
      %v299 = vlaneseq
      %v300 = vand.u32 %v299, 127
      %v301 = vadd.s32 %v300, 128
      %v302 = vstv %s298
      %v303 = vadd.s32 %v302, %v300
      %v304 = vadd.s32 %v302, %v301
      %vm305 = vcmp.lt.s32.totalorder %v303, 256
      %vm306 = vcmp.lt.s32.totalorder %v304, 256
      %v307 = vsel %vm305, %v296, 0.0
      %v308 = vsel %vm306, %v297, 0.0
      %v309 = vadd.f32 %v307, %v308
      %310 = vadd.xlane.f32.xlu0 %v309
      %v311 = vpop.xlane.xlu0 %310
      %vm312 = vcmask 0
      %313 = vst.msk [vmem:[%s204] sm:$0x1] %vm312, %v311
      %s314 = sadd.s32 %s17, %s18
      %p315 = scmp.lt.s32.totalorder %s314, 1
      %s316 = scalar_select %p315, %s314, 1
      %s317 = scalar_lea.vmem %s2, %s316
      // Predicated region
      $region29: #{context_focal_loss.1} parent=27 // pred_check
        %p318 = pneg %p101
      $region30: #{context_focal_loss.1} parent=27 // pred_check_branch
        %320 = sbr.rel (%p318) target = $region32
      $region31: #{context_focal_loss.1} parent=27 // pred_region
        %s321 = sadd.s32 %s17, %s18
      $region32: #{context_focal_loss.1} parent=27 // pred_fallthru
        _
    $region28: #{context_focal_loss.1} parent=5 // pred_fallthru
      _
    %p322 = scmp.le.s32.totalorder 2, %s8
    // Predicated region
    $region33: #{context_focal_loss.1} parent=5 // pred_check
      %p323 = pneg %p322
    $region34: #{context_focal_loss.1} parent=5 // pred_check_branch
      %325 = sbr.rel (%p323) target = $region36
    $region35: #{context_focal_loss.1} parent=5 // pred_region
      %s326 = ssub.s32 %s8, 2
      // Predicated region
      $region37: #{context_focal_loss.1} parent=35 // pred_check
        %p327 = pneg %p107
      $region38: #{context_focal_loss.1} parent=35 // pred_check_branch
        %329 = sbr.rel (%p327) target = $region40
      $region39: #{context_focal_loss.1} parent=35 // pred_region
        %s330 = sadd.s32 %s19, %s20
        %p331 = scmp.lt.s32.totalorder %s330, 1
        %s332 = scalar_select %p331, %s330, 1
        %s333 = scalar_lea.vmem %s2, %s332
      $region40: #{context_focal_loss.1} parent=35 // pred_fallthru
        _
    $region36: #{context_focal_loss.1} parent=5 // pred_fallthru
      _
  $region6: #{context_focal_loss.1} parent=0 // loop_footer
    %s12 = sadd.s32 1, %s8
  $region7: #{context_focal_loss.1} parent=0 // loop_footer_branch
    %7 = sbr.rel target = $region3
  $region8: #{context_focal_loss.1} parent=0 // loop_exit
    _

</llo_original>
